<compile_context>
chip_gen: v5e
topology: v5e:2x2
jax: 0.10.0
libtpu: 0.0.40
codegen_flags: <defaults>
</compile_context>

<pallas_src>
import functools
import math
import re

import jax
import jax.numpy as jnp
from jax import lax
from jax.experimental import pallas as pl
from jax.experimental.pallas import tpu as pltpu

_MIB = 1024 * 1024


def _cdiv(a: int, b: int) -> int:
    return -(-a // b)


def _round_up(x: int, m: int) -> int:
    return _cdiv(x, m) * m


def _tpu_generation() -> int:
    try:
        kind = jax.devices()[0].device_kind
    except Exception:
        return 6
    m = re.search(r"(\d+)", kind)
    return int(m.group(1)) if m else 6


def _vmem_capacity_bytes(default: int) -> int:
    try:
        return int(getattr(pltpu.get_tpu_info(), "vmem_capacity_bytes", default))
    except Exception:
        return default


# --------------------------------------------------------------------------
# pass 1: fused K|V projection (one GEMM per kv tile, computed once)
# --------------------------------------------------------------------------
def _kv_proj_kernel(c_ref, wkv_ref, bkv_ref, kv_ref, *, compute_dtype):
    c = c_ref[0].astype(compute_dtype)                               # (TKV, D)
    kv = jnp.dot(c, wkv_ref[...],
                 preferred_element_type=jnp.float32) + bkv_ref[...]  # (TKV, 2D)
    kv_ref[0] = kv.astype(kv_ref.dtype)


# --------------------------------------------------------------------------
# pass 2: flash attention + output projection
# --------------------------------------------------------------------------
def _replicate_heads(vals, col_head, tq, d_model):
    """Build a (tq, d_model) tensor with vals[h] replicated across head h's
    k_channels columns (select chain; avoids sub-128-lane concatenation)."""
    full = jnp.broadcast_to(vals[0], (tq, d_model))
    for h in range(1, len(vals)):
        full = jnp.where(col_head == h, vals[h], full)
    return full


def _mha_flash_kernel(x_ref, kv_ref, wq_ref, bq_ref, wo_ref, bo_ref,
                      out_ref, q_scr, acc_scr, m_scr, l_scr, *,
                      n_heads: int, k_channels: int, kv_len: int,
                      compute_dtype, head_packing: bool, approx_recip: bool):
    """One (batch, q-tile, kv-tile) grid step.

    x_ref:   (1, TQ,  D)    query-side activations (time-major)
    kv_ref:  (1, TKV, 2D)   pre-projected K|V tile (compute dtype)
    wq/wo:   (D, D)/(D, Do) projection weights (in, out), compute dtype
    bq/bo:   (1, D)/(1, Do) biases, f32
    out_ref: (1, TQ, Do)
    q_scr:   (TQ, D)        pre-scaled projected Q (compute dtype)
    acc_scr: (TQ, D)  f32   PV accumulator slab (full-width updates only)
    m_scr:   (H, TQ, 1) f32 per-head running max
    l_scr:   (H, TQ, 1) f32 per-head running sum
    """
    ki = pl.program_id(2)
    n_kv = pl.num_programs(2)
    d_model = n_heads * k_channels
    tq = acc_scr.shape[0]
    tkv = kv_ref.shape[1]
    scale = 1.0 / math.sqrt(k_channels)

    # ---- init (once per (b, q-tile)): project+scale Q, reset flash state ----
    @pl.when(ki == 0)
    def _init():
        x = x_ref[0].astype(compute_dtype)                           # (TQ, D)
        q = jnp.dot(x, wq_ref[...],
                    preferred_element_type=jnp.float32) + bq_ref[...]
        q_scr[...] = (q * scale).astype(compute_dtype)
        m_scr[...] = jnp.full(m_scr.shape, -jnp.inf, dtype=m_scr.dtype)
        l_scr[...] = jnp.zeros(l_scr.shape, dtype=l_scr.dtype)
        acc_scr[...] = jnp.zeros(acc_scr.shape, dtype=acc_scr.dtype)

    kv = kv_ref[0]                                                   # (TKV, 2D)
    k = kv[:, :d_model]                                              # lane-aligned
    v = kv[:, d_model:]
    q = q_scr[...]

    # Head id of each feature column (1, D): used both for the block-diagonal
    # packing masks and for replicating per-head alpha / 1/l across columns.
    col_head = lax.broadcasted_iota(jnp.int32, (1, d_model), 1) // k_channels

    # Validity of kv positions in this tile (only when Tkv was padded to a
    # multiple of the 128-aligned kv tile); padded scores get -inf -> p = 0.
    if kv_len % tkv != 0:
        pos = ki * tkv + lax.broadcasted_iota(jnp.int32, (1, tkv), 1)
        kv_valid = pos < kv_len
    else:
        kv_valid = None

    dnums = (((1,), (1,)), ((), ()))   # contract last dims: no explicit k.T

    def _update_head(h, s_h):
        """Online-softmax bookkeeping for head h. Returns (p_h f32, alpha)."""
        if kv_valid is not None:
            s_h = jnp.where(kv_valid, s_h, -jnp.inf)
        m_prev = m_scr[h]                                            # (TQ, 1)
        m_new = jnp.maximum(m_prev, jnp.max(s_h, axis=-1, keepdims=True))
        alpha = jnp.exp(m_prev - m_new)                              # (TQ, 1)
        p_h = jnp.exp(s_h - m_new)                                   # (TQ, TKV)
        l_scr[h] = alpha * l_scr[h] + jnp.sum(p_h, axis=-1, keepdims=True)
        m_scr[h] = m_new
        return p_h, alpha

    alpha_parts = []
    if head_packing:
        # Block-diagonal head packing (256-wide MXU): one QK^T GEMM with full
        # D-wide contraction and one PV GEMM producing the full (TQ, D) slab,
        # no 32-lane operand slices anywhere on the MXU path.
        k_parts, v_parts = [], []
        for h in range(n_heads):
            mask_h = (col_head == h).astype(compute_dtype)           # (1, D)
            k_parts.append(k * mask_h)
            v_parts.append(v * mask_h)
        k_bd = jnp.concatenate(k_parts, axis=0)                      # (H*TKV, D)
        v_bd = jnp.concatenate(v_parts, axis=0)                      # (H*TKV, D)
        s_all = lax.dot_general(q, k_bd, dnums,
                                preferred_element_type=jnp.float32)  # (TQ, H*TKV)
        p_parts = []
        for h in range(n_heads):
            p_h, alpha = _update_head(h, s_all[:, h * tkv:(h + 1) * tkv])
            p_parts.append(p_h.astype(compute_dtype))
            alpha_parts.append(alpha)
        p_all = jnp.concatenate(p_parts, axis=-1)                    # (TQ, H*TKV)
        pv = jnp.dot(p_all, v_bd, preferred_element_type=jnp.float32)  # (TQ, D)
    else:
        # Per-head GEMMs (v5e path: 128-wide MXU, packing ~break-even). PV
        # pieces are assembled into one full-width value; the VMEM accumulator
        # is still only touched by the single full-slab update below.
        pv_parts = []
        for h in range(n_heads):
            lo = h * k_channels
            hi = lo + k_channels
            s_h = lax.dot_general(q[:, lo:hi], k[:, lo:hi], dnums,
                                  preferred_element_type=jnp.float32)
            p_h, alpha = _update_head(h, s_h)
            pv_parts.append(jnp.dot(p_h.astype(compute_dtype), v[:, lo:hi],
                                    preferred_element_type=jnp.float32))
            alpha_parts.append(alpha)
        pv = jnp.concatenate(pv_parts, axis=-1)                      # (TQ, D)

    # One unmasked full-width accumulator update per kv step (review item #1).
    alpha_full = _replicate_heads(alpha_parts, col_head, tq, d_model)
    acc_scr[...] = alpha_full * acc_scr[...] + pv

    # ---- finalize (last kv tile): normalize + output projection -------------
    @pl.when(ki == n_kv - 1)
    def _finalize():
        inv_parts = []
        for h in range(n_heads):
            if approx_recip:
                inv = pl.reciprocal(l_scr[h], approx=True)           # EUP slot
            else:
                inv = 1.0 / l_scr[h]                                 # exact f32
            inv_parts.append(inv)
        inv_full = _replicate_heads(inv_parts, col_head, tq, d_model)
        o = (acc_scr[...] * inv_full).astype(compute_dtype)          # (TQ, D)
        out = jnp.dot(o, wo_ref[...],
                      preferred_element_type=jnp.float32) + bo_ref[...]
        out_ref[0] = out.astype(out_ref.dtype)


# --------------------------------------------------------------------------
# wrappers
# --------------------------------------------------------------------------
def multi_head_attention_btd(x_btd, c_btd, params, *, n_heads: int,
                             compute_dtype=jnp.bfloat16,
                             tq_tile=None, tkv_tile=None, head_packing=None):
    """Time-major entry point: x (B, Tq, D), c (B, Tkv, D) -> (B, Tq, Dout)."""
    wq, bq, wk, bk, wv, bv, wo, bo = params
    B, Tq, D = x_btd.shape
    Tkv = c_btd.shape[1]
    Dout = wo.shape[1]
    assert D % n_heads == 0
    k_ch = D // n_heads

    cdt = jnp.dtype(compute_dtype)
    cs = cdt.itemsize
    xs = jnp.dtype(x_btd.dtype).itemsize
    approx_recip = cdt != jnp.dtype(jnp.float32)

    # ---- per-generation defaults (review: v5e/v6e vs v7x) --------------------
    gen = _tpu_generation()
    if gen >= 7:
        vmem_cap = 48 * _MIB          # 64 MiB VMEM / TC
        tq_def, tkv_def = 256, 1024
    elif gen <= 3:
        vmem_cap = 12 * _MIB
        tq_def, tkv_def = 128, 512
    else:
        vmem_cap = 96 * _MIB          # v4/v5e/v6e: 128 MiB VMEM
        tq_def, tkv_def = 512, 1024
    vmem_cap = min(vmem_cap, (3 * _vmem_capacity_bytes(128 * _MIB)) // 4)
    if head_packing is None:
        # 256-wide MXUs (v6e/v7x) benefit; v5e's 128-wide MXU is ~break-even.
        head_packing = gen >= 6

    tq_t = max(8, ((tq_tile if tq_tile else tq_def) // 8) * 8)
    tkv_t = max(128, ((tkv_tile if tkv_tile else tkv_def) // 128) * 128)
    tq = min(_round_up(Tq, 8), tq_t)           # sublane-aligned q tile
    tkv = min(_round_up(Tkv, 128), tkv_t)      # lane-dense kv tile (128-mult)

    # v7x: 2 TensorCores share the "parallel" grid axes -> need >= 2 work units.
    if gen >= 7 and B * _cdiv(Tq, tq) < 2 and Tq > 8:
        tq = min(tq, _round_up(_cdiv(Tq, 2), 8))

    def flash_vmem(tq_, tkv_):
        tiles = 2 * (tq_ * D * xs + tkv_ * 2 * D * cs + tq_ * Dout * 4)
        weights = 2 * cs * (D * D + D * Dout) + 2 * 4 * (D + Dout)
        scratch = tq_ * D * (cs + 4) + 2 * n_heads * tq_ * 128 * 4
        if head_packing:
            live = (tq_ * n_heads * tkv_ * (4 + cs)       # s_all f32 + p_all
                    + 4 * n_heads * tkv_ * D * cs         # k_bd / v_bd (+slack)
                    + 4 * tq_ * D * 4)                    # pv / alpha_full / misc
        else:
            live = 3 * tq_ * tkv_ * 4 + 4 * tq_ * D * 4
        return tiles + weights + scratch + live + 4 * _MIB   # + Mosaic scratch

    while flash_vmem(tq, tkv) > vmem_cap and tkv > 128:
        tkv = max(128, _round_up(tkv // 2, 128))
    while flash_vmem(tq, tkv) > vmem_cap and tq > 16:
        tq = max(16, _round_up(tq // 2, 8))

    Tq_pad = _cdiv(Tq, tq) * tq
    Tkv_pad = _cdiv(Tkv, tkv) * tkv
    x_p = x_btd if Tq_pad == Tq else jnp.pad(
        x_btd, ((0, 0), (0, Tq_pad - Tq), (0, 0)))
    c_p = c_btd if Tkv_pad == Tkv else jnp.pad(
        c_btd, ((0, 0), (0, Tkv_pad - Tkv), (0, 0)))

    # MXU weights in compute dtype; biases stay f32 (added to f32 accumulators).
    wq_c = wq.astype(cdt)
    wo_c = wo.astype(cdt)
    wkv_c = jnp.concatenate([wk, wv], axis=1).astype(cdt)            # (D, 2D)
    bq2 = bq.reshape(1, D).astype(jnp.float32)
    bkv2 = jnp.concatenate([bk, bv]).reshape(1, 2 * D).astype(jnp.float32)
    bo2 = bo.reshape(1, Dout).astype(jnp.float32)

    # ---- pass 1: project K|V once (no per-q-tile re-projection / re-DMA) ----
    kv = pl.pallas_call(
        functools.partial(_kv_proj_kernel, compute_dtype=cdt),
        out_shape=jax.ShapeDtypeStruct((B, Tkv_pad, 2 * D), cdt),
        grid_spec=pltpu.PrefetchScalarGridSpec(
            num_scalar_prefetch=0,
            grid=(B, Tkv_pad // tkv),
            in_specs=[
                pl.BlockSpec((1, tkv, D), lambda b, i: (b, i, 0)),
                pl.BlockSpec((D, 2 * D), lambda b, i: (0, 0)),
                pl.BlockSpec((1, 2 * D), lambda b, i: (0, 0)),
            ],
            out_specs=pl.BlockSpec((1, tkv, 2 * D), lambda b, i: (b, i, 0)),
        ),
        compiler_params=pltpu.CompilerParams(
            dimension_semantics=("parallel", "parallel"),
            vmem_limit_bytes=int(min(vmem_cap, 32 * _MIB))),
    )(c_p, wkv_c, bkv2)

    # ---- pass 2: flash attention + output projection -------------------------
    kernel = functools.partial(
        _mha_flash_kernel, n_heads=n_heads, k_channels=k_ch, kv_len=Tkv,
        compute_dtype=cdt, head_packing=head_packing,
        approx_recip=approx_recip)

    def const_spec(shape):
        # Constant index_map: block is DMA'd once and reused across the grid.
        return pl.BlockSpec(shape, lambda b, qi, ki: (0, 0))

    grid = (B, Tq_pad // tq, Tkv_pad // tkv)
    est = flash_vmem(tq, tkv)
    vmem_limit = int(min(vmem_cap, max(est + est // 4, 16 * _MIB)))

    out_pad = pl.pallas_call(
        kernel,
        out_shape=jax.ShapeDtypeStruct((B, Tq_pad, Dout), jnp.float32),
        grid_spec=pltpu.PrefetchScalarGridSpec(
            num_scalar_prefetch=0,
            grid=grid,
            in_specs=[
                pl.BlockSpec((1, tq, D), lambda b, qi, ki: (b, qi, 0)),      # x
                pl.BlockSpec((1, tkv, 2 * D), lambda b, qi, ki: (b, ki, 0)), # K|V
                const_spec((D, D)), const_spec((1, D)),                      # wq, bq
                const_spec((D, Dout)), const_spec((1, Dout)),                # wo, bo
            ],
            out_specs=pl.BlockSpec((1, tq, Dout), lambda b, qi, ki: (b, qi, 0)),
            scratch_shapes=[
                pltpu.VMEM((tq, D), cdt),                    # pre-scaled Q
                pltpu.VMEM((tq, D), jnp.float32),            # PV accumulator slab
                pltpu.VMEM((n_heads, tq, 1), jnp.float32),   # running max
                pltpu.VMEM((n_heads, tq, 1), jnp.float32),   # running sum
            ],
        ),
        compiler_params=pltpu.CompilerParams(
            dimension_semantics=("parallel", "parallel", "arbitrary"),
            vmem_limit_bytes=vmem_limit),
    )(x_p, kv, wq_c, bq2, wo_c, bo2)

    return out_pad if Tq_pad == Tq else out_pad[:, :Tq, :]


def multi_head_attention(x_nct, c_nct, params, *, n_heads: int,
                         compute_dtype=jnp.bfloat16,
                         tq_tile=None, tkv_tile=None, head_packing=None):
    """PyTorch-layout entry point: x (B, d_model, Tq), c (B, d_model, Tkv).

    Matches MultiHeadAttention.forward with attn_mask=None and p_dropout=0,
    returning (B, out_channels, Tq). Callers that keep activations time-major
    should use multi_head_attention_btd directly (skips both transposes).
    """
    x = jnp.transpose(x_nct, (0, 2, 1))
    c = jnp.transpose(c_nct, (0, 2, 1))
    out = multi_head_attention_btd(
        x, c, params, n_heads=n_heads, compute_dtype=compute_dtype,
        tq_tile=tq_tile, tkv_tile=tkv_tile, head_packing=head_packing)
    return jnp.transpose(out, (0, 2, 1))


# --------------------------------------------------------------------------
# pure-JAX reference (PyTorch forward with attn_mask=None, dropout=0)
# --------------------------------------------------------------------------
def _reference(x_nct, c_nct, params, *, n_heads: int):
    wq, bq, wk, bk, wv, bv, wo, bo = params
    B, D, Tq = x_nct.shape
    Tkv = c_nct.shape[2]
    k_ch = D // n_heads

    x = jnp.transpose(x_nct, (0, 2, 1))
    c = jnp.transpose(c_nct, (0, 2, 1))
    q = x @ wq + bq
    k = c @ wk + bk
    v = c @ wv + bv

    def split(t, T):
        return jnp.transpose(t.reshape(B, T, n_heads, k_ch), (0, 2, 1, 3))

    qh, kh, vh = split(q, Tq), split(k, Tkv), split(v, Tkv)
    s = jnp.einsum("bhqd,bhkd->bhqk", qh / math.sqrt(k_ch), kh)
    p = jax.nn.softmax(s, axis=-1)
    o = jnp.einsum("bhqk,bhkd->bhqd", p, vh)
    o = jnp.transpose(o, (0, 2, 1, 3)).reshape(B, Tq, D)
    out = o @ wo + bo
    return jnp.transpose(out, (0, 2, 1))


if __name__ == "__main__":
    # Lane-dense feature dims (D = Dout = 128); ragged Tq/Tkv exercise the
    # q-padding and the 128-aligned kv tiles with -inf masking of the tail.
    B = 2
    d_model = 128
    out_channels = 128
    n_heads = 4            # k_channels = 32
    Tq = 40
    Tkv = 200

    key = jax.random.PRNGKey(0)
    ks = jax.random.split(key, 10)

    # Conv1d(d, d, 1) weight is (out, in, 1); we store the transposed (in, out)
    # matrix so every projection is y = x @ W + b.
    def winit(k, shape, fan_in):
        return jax.random.normal(k, shape, jnp.float32) / math.sqrt(fan_in)

    wq = winit(ks[0], (d_model, d_model), d_model)
    wk = winit(ks[1], (d_model, d_model), d_model)
    wv = winit(ks[2], (d_model, d_model), d_model)
    wo = winit(ks[3], (d_model, out_channels), d_model)
    bq = 0.1 * jax.random.normal(ks[4], (d_model,), jnp.float32)
    bk = 0.1 * jax.random.normal(ks[5], (d_model,), jnp.float32)
    bv = 0.1 * jax.random.normal(ks[6], (d_model,), jnp.float32)
    bo = 0.1 * jax.random.normal(ks[7], (out_channels,), jnp.float32)
    params = (wq, bq, wk, bk, wv, bv, wo, bo)

    x = jax.random.normal(ks[8], (B, d_model, Tq), jnp.float32)   # NCT
    c = jax.random.normal(ks[9], (B, d_model, Tkv), jnp.float32)  # NCT

    ref = _reference(x, c, params, n_heads=n_heads)

    # 1) f32 operands, per-head path (v5e-style), small tiles so the grid and
    #    the online-softmax accumulation across kv tiles are exercised.
    out = multi_head_attention(x, c, params, n_heads=n_heads,
                               compute_dtype=jnp.float32,
                               tq_tile=16, tkv_tile=128, head_packing=False)
    out = jax.block_until_ready(out)
    assert out.shape == (B, out_channels, Tq)
    assert jnp.allclose(out, ref, atol=5e-3, rtol=5e-3), (
        f"f32 per-head mismatch, max abs err {jnp.max(jnp.abs(out - ref))}")

    # 2) f32 operands, block-diagonal head-packed path (v6e/v7x-style).
    out = multi_head_attention(x, c, params, n_heads=n_heads,
                               compute_dtype=jnp.float32,
                               tq_tile=16, tkv_tile=128, head_packing=True)
    out = jax.block_until_ready(out)
    assert out.shape == (B, out_channels, Tq)
    assert jnp.allclose(out, ref, atol=5e-3, rtol=5e-3), (
        f"f32 packed mismatch, max abs err {jnp.max(jnp.abs(out - ref))}")

    # 3) Default bf16-MXU path with per-generation tiles / VMEM budget.
    out = multi_head_attention(x, c, params, n_heads=n_heads)
    out = jax.block_until_ready(out)
    assert out.shape == (B, out_channels, Tq)
    assert jnp.allclose(out, ref, atol=1.5e-1, rtol=5e-2), (
        f"bf16 kernel mismatch, max abs err {jnp.max(jnp.abs(out - ref))}")

    print("KERNEL_OK")
</pallas_src>

<mosaic_0001>
module attributes {stable_mosaic.version = 11 : i64} {
  func.func @_kv_proj_kernel(%arg0: i32, %arg1: i32, %arg2: memref<1x128x128xf32, #tpu.memory_space<vmem>>, %arg3: memref<128x256xf32, #tpu.memory_space<vmem>>, %arg4: memref<1x256xf32, #tpu.memory_space<vmem>>, %arg5: memref<1x128x256xf32, #tpu.memory_space<vmem>>) attributes {dimension_semantics = [#tpu.dimension_semantics<parallel>, #tpu.dimension_semantics<parallel>], iteration_bounds = array<i64: 2, 2>, scalar_prefetch = 0 : i64, scratch_operands = 0 : i64, tpu.core_type = #tpu.core_type<tc>, window_params = [{transform_indices = @transform_0, window_bounds = array<i64: 1, 128, 128>}, {pipeline_mode = #tpu.pipeline_mode<synchronous>, transform_indices = @transform_1, window_bounds = array<i64: 128, 256>}, {pipeline_mode = #tpu.pipeline_mode<synchronous>, transform_indices = @transform_2, window_bounds = array<i64: 1, 256>}, {transform_indices = @transform_3, window_bounds = array<i64: 1, 128, 256>}]} {
    %c0 = arith.constant 0 : index
    %c0_0 = arith.constant 0 : index
    %c0_1 = arith.constant 0 : index
    %0 = vector.load %arg2[%c0, %c0_0, %c0_1] : memref<1x128x128xf32, #tpu.memory_space<vmem>>, vector<1x128x128xf32>
    %1 = vector.shape_cast %0 : vector<1x128x128xf32> to vector<128x128xf32>
    %c0_2 = arith.constant 0 : index
    %c0_3 = arith.constant 0 : index
    %2 = vector.load %arg3[%c0_2, %c0_3] : memref<128x256xf32, #tpu.memory_space<vmem>>, vector<128x256xf32>
    %cst = arith.constant dense<0.000000e+00> : vector<128x256xf32>
    %3 = tpu.matmul %1, %2, %cst {dimension_numbers = #tpu.dot_dimension_numbers<[1], [0], [0], [1], [0, 0, 1, 1], [], []>} : vector<128x128xf32>, vector<128x256xf32>, vector<128x256xf32> -> vector<128x256xf32>
    %c0_4 = arith.constant 0 : index
    %c0_5 = arith.constant 0 : index
    %4 = vector.load %arg4[%c0_4, %c0_5] : memref<1x256xf32, #tpu.memory_space<vmem>>, vector<1x256xf32>
    %5 = vector.broadcast %4 : vector<1x256xf32> to vector<128x256xf32>
    %6 = arith.addf %3, %5 : vector<128x256xf32>
    %c0_6 = arith.constant 0 : index
    %c0_7 = arith.constant 0 : index
    %c0_8 = arith.constant 0 : index
    %7 = vector.load %arg5[%c0_6, %c0_7, %c0_8] : memref<1x128x256xf32, #tpu.memory_space<vmem>>, vector<1x128x256xf32>
    %8 = vector.shape_cast %7 : vector<1x128x256xf32> to vector<128x256xf32>
    %9 = vector.shape_cast %6 : vector<128x256xf32> to vector<1x128x256xf32>
    tpu.vector_store %arg5[%c0_6, %c0_7, %c0_8], %9 {strides = array<i32>} : memref<1x128x256xf32, #tpu.memory_space<vmem>>, vector<1x128x256xf32>,
    return
  }
  func.func @transform_0(%arg0: i32, %arg1: i32) -> (i32, i32, i32) {
    %c0_i32 = arith.constant 0 : i32
    %c0_i32_0 = arith.constant 0 : i32
    return %arg0, %arg1, %c0_i32 : i32, i32, i32
  }
  func.func @transform_1(%arg0: i32, %arg1: i32) -> (i32, i32) {
    %c0_i32 = arith.constant 0 : i32
    %c0_i32_0 = arith.constant 0 : i32
    %c0_i32_1 = arith.constant 0 : i32
    return %c0_i32, %c0_i32_0 : i32, i32
  }
  func.func @transform_2(%arg0: i32, %arg1: i32) -> (i32, i32) {
    %c0_i32 = arith.constant 0 : i32
    %c0_i32_0 = arith.constant 0 : i32
    %c0_i32_1 = arith.constant 0 : i32
    return %c0_i32, %c0_i32_0 : i32, i32
  }
  func.func @transform_3(%arg0: i32, %arg1: i32) -> (i32, i32, i32) {
    %c0_i32 = arith.constant 0 : i32
    %c0_i32_0 = arith.constant 0 : i32
    return %arg0, %arg1, %c0_i32 : i32, i32, i32
  }
}

</mosaic_0001>

<llo_original>
// kernel: tpu_custom_call.1
$region0: #{tpu_custom_call.1}
  #allocation0 [shape = 'u32[]', space=smem, size = 0x4, offset = 0x4, fixed_abs, tag = 'smem constant byte address 0x4 - core index']
  #allocation1 [shape = 'u32[72,128]{1,0:T(1,128)}', space=vmem, size = 0x9000, scoped, tag = 'internal scratch']
  %s0 = inlined_call_operand.hbm [shape: f32[2,256,128], index: 0, kind: input, shape index: {}]
  %s1 = inlined_call_operand.hbm [shape: f32[128,256], index: 1, kind: input, shape index: {}]
  %s2 = inlined_call_operand.hbm [shape: f32[1,256], index: 2, kind: input, shape index: {}]
  %s3 = inlined_call_operand.hbm [shape: f32[2,256,256], index: 3, kind: output, shape index: {}]
  %s4 = sld [smem:[#allocation0]]
  $region57: #{tpu_custom_call.1} parent=0
    _
  %s6 = ssub.s32 1, %s4
  %s7 = scalar_select 0, %s6, %s4
  $region1: #{tpu_custom_call.1} parent=0
    #allocation2 [shape = 'u8[131072]{0}', space=vmem, size = 0x20000, scoped, tag = 'input window, operand 0']
    #allocation3 [shape = 's32[2]{0}', space=sflag, size = 0x8, scoped, tag = 'scoped memory for tpu_custom_call.1']
    #allocation4 [shape = 's32[2]{0}', space=sflag, size = 0x8, scoped, tag = 'scoped memory for tpu_custom_call.1']
    #allocation5 [shape = 'u8[131072]{0}', space=vmem, size = 0x20000, scoped, tag = 'input window, operand 1, single buffered']
    #allocation6 [shape = 's32[1]{0}', space=sflag, size = 0x4, scoped, tag = 'scoped memory for tpu_custom_call.1']
    #allocation7 [shape = 'u8[1024]{0}', space=vmem, size = 0x400, scoped, tag = 'input window, operand 2, single buffered']
    #allocation8 [shape = 'u8[262144]{0}', space=vmem, size = 0x40000, scoped, tag = 'output window, operand 0']
    %8 = vsyncpa [#allocation3], 0
    %s9 = scalar_lea.sflag [#allocation3], 1
    %10 = vsyncpa %s9, 0
    %11 = vsyncpa [#allocation6], 0
    %12 = vsyncpa [#allocation4], 0
    %s13 = scalar_lea.sflag [#allocation4], 1
    %14 = vsyncpa %s13, 0
    loop: start=0, step=1, limit=6
    $region2: #{tpu_custom_call.1} parent=1 // loop_pre_header
      _
    $region3: #{tpu_custom_call.1} parent=1 // loop_header
      %s16 = sphi 0, %s20
      %p17 = scmp.ge.s32.totalorder %s16, 6
      %s23 = sphi 0, %s35
      %s24 = sphi 0, %s31
      %s25 = sphi 0, %s23
      %s26 = sphi 0, %s24
      %s27 = sphi 0, %s25
      %s28 = sphi 0, %s26
      %s40 = sphi 0, %s42
      %s43 = sphi 0, %s40
      %s44 = sphi 0, %s43
      %s60 = sphi 0, %s44
      %s64 = sphi 0, %s64
      %s66 = sphi 0, %s64
      %s67 = sphi 0, %s66
      %s81 = sphi 0, %s67
      %s85 = sphi 0, %s85
      %s87 = sphi 0, %s85
      %s88 = sphi 0, %s87
      %s102 = sphi 0, %s88
      %s110 = sphi 0, %s112
      %s113 = sphi 0, %s110
      %s114 = sphi 0, %s113
      %s130 = sphi 0, %s114
    $region4: #{tpu_custom_call.1} parent=1 // loop_header_branch
      %19 = sbr.rel (%p17) target = $region8
    $region5: #{tpu_custom_call.1} parent=1 // loop_body
      %s21 = ssub.s32 %s16, 1
      %s22 = ssub.s32 %s16, 2
      %s29 = sadd.s32 1, %s24
      %p30 = scmp.ge.s32.totalorder %s29, 2
      %s31 = scalar_select %p30, 0, %s29
      %s32 = sadd.s32 1, %s23
      %s33 = scalar_select %p30, %s32, %s23
      %p34 = scmp.ge.s32.totalorder %s33, 2
      %s35 = scalar_select %p34, 0, %s33
      %s36 = ssub.s32 %s23, %s35
      %s37 = ssub.s32 %s24, %s31
      %s38 = sor.u32 %s36, %s37
      %p39 = scmp.eq.s32.totalorder %s38, 0
      %s41 = sadd.s32 %s40, 1
      %s42 = scalar_select %p39, %s40, %s41
      %p45 = pneg %p39
      %p46 = scmp.eq.s32.totalorder %s16, 3
      %p47 = por %p45, %p46
      %p48 = scmp.ne.s32.totalorder %s40, %s43
      %p49 = scmp.eq.s32.totalorder %s16, 0
      %p50 = por %p48, %p49
      %p51 = scmp.ne.s32.totalorder %s40, %s43
      %p52 = scmp.eq.s32.totalorder %s21, 3
      %p53 = por %p51, %p52
      %p54 = scmp.ne.s32.totalorder %s43, %s44
      %p55 = scmp.eq.s32.totalorder %s21, 0
      %p56 = por %p54, %p55
      %p57 = scmp.ne.s32.totalorder %s43, %s44
      %p58 = scmp.eq.s32.totalorder %s22, 3
      %p59 = por %p57, %p58
      %p61 = scmp.ne.s32.totalorder %s44, %s60
      %p62 = scmp.eq.s32.totalorder %s22, 0
      %p63 = por %p61, %p62
      %s65 = sadd.s32 %s64, 1
      %p68 = scmp.eq.s32.totalorder %s16, 3
      %p69 = scmp.ne.s32.totalorder %s64, %s66
      %p70 = scmp.eq.s32.totalorder %s16, 0
      %p71 = por %p69, %p70
      %p72 = scmp.ne.s32.totalorder %s64, %s66
      %p73 = scmp.eq.s32.totalorder %s21, 3
      %p74 = por %p72, %p73
      %p75 = scmp.ne.s32.totalorder %s66, %s67
      %p76 = scmp.eq.s32.totalorder %s21, 0
      %p77 = por %p75, %p76
      %p78 = scmp.ne.s32.totalorder %s66, %s67
      %p79 = scmp.eq.s32.totalorder %s22, 3
      %p80 = por %p78, %p79
      %p82 = scmp.ne.s32.totalorder %s67, %s81
      %p83 = scmp.eq.s32.totalorder %s22, 0
      %p84 = por %p82, %p83
      %s86 = sadd.s32 %s85, 1
      %p89 = scmp.eq.s32.totalorder %s16, 3
      %p90 = scmp.ne.s32.totalorder %s85, %s87
      %p91 = scmp.eq.s32.totalorder %s16, 0
      %p92 = por %p90, %p91
      %p93 = scmp.ne.s32.totalorder %s85, %s87
      %p94 = scmp.eq.s32.totalorder %s21, 3
      %p95 = por %p93, %p94
      %p96 = scmp.ne.s32.totalorder %s87, %s88
      %p97 = scmp.eq.s32.totalorder %s21, 0
      %p98 = por %p96, %p97
      %p99 = scmp.ne.s32.totalorder %s87, %s88
      %p100 = scmp.eq.s32.totalorder %s22, 3
      %p101 = por %p99, %p100
      %p103 = scmp.ne.s32.totalorder %s88, %s102
      %p104 = scmp.eq.s32.totalorder %s22, 0
      %p105 = por %p103, %p104
      %s106 = ssub.s32 %s23, %s35
      %s107 = ssub.s32 %s24, %s31
      %s108 = sor.u32 %s106, %s107
      %p109 = scmp.eq.s32.totalorder %s108, 0
      %s111 = sadd.s32 %s110, 1
      %s112 = scalar_select %p109, %s110, %s111
      %p115 = pneg %p109
      %p116 = scmp.eq.s32.totalorder %s16, 3
      %p117 = por %p115, %p116
      %p118 = scmp.ne.s32.totalorder %s110, %s113
      %p119 = scmp.eq.s32.totalorder %s16, 0
      %p120 = por %p118, %p119
      %p121 = scmp.ne.s32.totalorder %s110, %s113
      %p122 = scmp.eq.s32.totalorder %s21, 3
      %p123 = por %p121, %p122
      %p124 = scmp.ne.s32.totalorder %s113, %s114
      %p125 = scmp.eq.s32.totalorder %s21, 0
      %p126 = por %p124, %p125
      %p127 = scmp.ne.s32.totalorder %s113, %s114
      %p128 = scmp.eq.s32.totalorder %s22, 3
      %p129 = por %p127, %p128
      %p131 = scmp.ne.s32.totalorder %s114, %s130
      %p132 = scmp.eq.s32.totalorder %s22, 0
      %p133 = por %p131, %p132
      %p134 = scmp.le.s32.totalorder 1, %s16
      %p135 = scmp.lt.s32.totalorder %s16, 5
      %p136 = pnand %p134, %p135
      %p137 = pneg %p136
      // Predicated region
      $region9: #{tpu_custom_call.1} parent=5 // pred_check
        _
      $region10: #{tpu_custom_call.1} parent=5 // pred_check_branch
        %139 = sbr.rel (%p136) target = $region12
      $region11: #{tpu_custom_call.1} parent=5 // pred_region
        %s140 = ssub.s32 %s16, 1
        // Predicated region
        $region13: #{tpu_custom_call.1} parent=11 // pred_check
          %p141 = pneg %p77
        $region14: #{tpu_custom_call.1} parent=11 // pred_check_branch
          %143 = sbr.rel (%p141) target = $region16
        $region15: #{tpu_custom_call.1} parent=11 // pred_region
          %145 = vsyncadd [#allocation6], 0
          %s146 = sshll.u32 %s1, 4
          %s147 = int_to_ptr.hbm [resolvable:$true] %s146
          %s148 = sshll.u32 [#allocation5], 4
          %s149 = int_to_ptr.vmem [resolvable:$true] %s148
          %154 = dma.hbm_to_vmem [thread:$0]  %s147, 4096, %s149, [#allocation6], 256, 256, 16
        $region16: #{tpu_custom_call.1} parent=11 // pred_fallthru
          _
        // Predicated region
        $region17: #{tpu_custom_call.1} parent=11 // pred_check
          %p155 = pneg %p98
        $region18: #{tpu_custom_call.1} parent=11 // pred_check_branch
          %157 = sbr.rel (%p155) target = $region20
        $region19: #{tpu_custom_call.1} parent=11 // pred_region
          %159 = vsyncadd [#allocation6], 0
          %s161 = sshll.u32 %s2, 4
          %s162 = int_to_ptr.hbm [resolvable:$true] %s161
          %s163 = sshll.u32 [#allocation7], 4
          %s164 = int_to_ptr.vmem [resolvable:$true] %s163
          %166 = dma.hbm_to_vmem [thread:$0]  %s162, 32, %s164, [#allocation6]
        $region20: #{tpu_custom_call.1} parent=11 // pred_fallthru
          _
      $region12: #{tpu_custom_call.1} parent=5 // pred_fallthru
        _
      %p167 = scmp.lt.s32.totalorder %s16, 4
      // Predicated region
      $region21: #{tpu_custom_call.1} parent=5 // pred_check
        %p168 = pneg %p167
      $region22: #{tpu_custom_call.1} parent=5 // pred_check_branch
        %170 = sbr.rel (%p168) target = $region24
      $region23: #{tpu_custom_call.1} parent=5 // pred_region
        // Predicated region
        $region25: #{tpu_custom_call.1} parent=23 // pred_check
          %p171 = pneg %p50
        $region26: #{tpu_custom_call.1} parent=23 // pred_check_branch
          %173 = sbr.rel (%p171) target = $region28
        $region27: #{tpu_custom_call.1} parent=23 // pred_region
          %s174 = sand.u32 %s40, 1
          %s175 = scalar_lea.sflag [#allocation3], %s174
          %s176 = sand.u32 %s40, 1
          %s177 = smul.addr %s176, 128
          %s178 = scalar_lea.vmem [#allocation2], %s177
          %s179 = smul.u32 16, %s24
          %181 = vsyncadd %s175, 0
          %s182 = smul.addr %s23, 32
          %s183 = sadd.s32 %s179, %s182
          %s184 = smul.addr %s183, 8
          %s185 = scalar_lea.hbm %s0, %s184
          %s186 = sshll.u32 %s185, 4
          %s187 = int_to_ptr.hbm [resolvable:$true] %s186
          %s188 = sshll.u32 %s178, 4
          %s189 = int_to_ptr.vmem [resolvable:$true] %s188
          %194 = dma.hbm_to_vmem [thread:$0]  %s187, 2048, %s189, %s175, 128, 128, 8
        $region28: #{tpu_custom_call.1} parent=23 // pred_fallthru
          _
      $region24: #{tpu_custom_call.1} parent=5 // pred_fallthru
        _
      %p195 = scmp.le.s32.totalorder 1, %s16
      %p196 = scmp.lt.s32.totalorder %s16, 5
      %p197 = pnand %p195, %p196
      %p198 = pneg %p197
      // Predicated region
      $region29: #{tpu_custom_call.1} parent=5 // pred_check
        _
      $region30: #{tpu_custom_call.1} parent=5 // pred_check_branch
        %200 = sbr.rel (%p197) target = $region32
      $region31: #{tpu_custom_call.1} parent=5 // pred_region
        %s201 = ssub.s32 %s16, 1
        %s202 = sand.u32 %s43, 1
        %s203 = scalar_lea.sflag [#allocation3], %s202
        %s204 = sand.u32 %s43, 1
        %s205 = smul.addr %s204, 128
        %s206 = scalar_lea.vmem [#allocation2], %s205
        // Predicated region
        $region33: #{tpu_custom_call.1} parent=31 // pred_check
          %p207 = pneg %p56
        $region34: #{tpu_custom_call.1} parent=31 // pred_check_branch
          %209 = sbr.rel (%p207) target = $region36
        $region35: #{tpu_custom_call.1} parent=31 // pred_region
          %211 = dma.done %s203, 2048
        $region36: #{tpu_custom_call.1} parent=31 // pred_fallthru
          _
        // Predicated region
        $region37: #{tpu_custom_call.1} parent=31 // pred_check
          %p212 = pneg %p77
        $region38: #{tpu_custom_call.1} parent=31 // pred_check_branch
          %214 = sbr.rel (%p212) target = $region40
        $region39: #{tpu_custom_call.1} parent=31 // pred_region
          %216 = dma.done [#allocation6], 4096
        $region40: #{tpu_custom_call.1} parent=31 // pred_fallthru
          _
        // Predicated region
        $region41: #{tpu_custom_call.1} parent=31 // pred_check
          %p217 = pneg %p98
        $region42: #{tpu_custom_call.1} parent=31 // pred_check_branch
          %219 = sbr.rel (%p217) target = $region44
        $region43: #{tpu_custom_call.1} parent=31 // pred_region
          %221 = dma.done [#allocation6], 32
        $region44: #{tpu_custom_call.1} parent=31 // pred_fallthru
          _
        %s222 = sand.u32 %s43, 1
        %s223 = scalar_lea.sflag [#allocation3], %s222
        %s224 = sand.u32 %s43, 1
        %s225 = smul.addr %s224, 128
        %s226 = scalar_lea.vmem [#allocation2], %s225
        %p227 = pneg %p56
        %p228 = pneg %p53
        %p229 = pneg %p77
        %p230 = pneg %p74
        %p231 = pneg %p98
        %p232 = pneg %p95
        %p233 = pneg %p126
        %p234 = pneg %p123
        %s235 = sand.u32 %s113, 1
        %s236 = scalar_lea.sflag [#allocation4], %s235
        %s237 = sand.u32 %s113, 1
        %s238 = smul.addr %s237, 256
        %s239 = scalar_lea.vmem [#allocation8], %s238
        %s240 = smul.u32 16, %s26
        %s241 = smul.u32 16, %s26
        %v242 = vld [vmem:[%s206] sm:$0xff]
        %v243 = vld [vmem:[%s206 + $0x8] sm:$0xff]
        %v244 = vld [vmem:[%s206 + $0x10] sm:$0xff]
        %v245 = vld [vmem:[%s206 + $0x18] sm:$0xff]
        %v246 = vld [vmem:[%s206 + $0x20] sm:$0xff]
        %v247 = vld [vmem:[%s206 + $0x28] sm:$0xff]
        %v248 = vld [vmem:[%s206 + $0x30] sm:$0xff]
        %v249 = vld [vmem:[%s206 + $0x38] sm:$0xff]
        %v250 = vld [vmem:[%s206 + $0x40] sm:$0xff]
        %v251 = vld [vmem:[%s206 + $0x48] sm:$0xff]
        %v252 = vld [vmem:[%s206 + $0x50] sm:$0xff]
        %v253 = vld [vmem:[%s206 + $0x58] sm:$0xff]
        %v254 = vld [vmem:[%s206 + $0x60] sm:$0xff]
        %v255 = vld [vmem:[%s206 + $0x68] sm:$0xff]
        %v256 = vld [vmem:[%s206 + $0x70] sm:$0xff]
        %v257 = vld [vmem:[%s206 + $0x78] sm:$0xff]
        %v258 = vld [vmem:[#allocation5] sm:$0xff]
        %v259 = vld [vmem:[#allocation5 + $0x8] sm:$0xff]
        %v260 = vld [vmem:[#allocation5 + $0x10] sm:$0xff]
        %v261 = vld [vmem:[#allocation5 + $0x18] sm:$0xff]
        %v262 = vld [vmem:[#allocation5 + $0x20] sm:$0xff]
        %v263 = vld [vmem:[#allocation5 + $0x28] sm:$0xff]
        %v264 = vld [vmem:[#allocation5 + $0x30] sm:$0xff]
        %v265 = vld [vmem:[#allocation5 + $0x38] sm:$0xff]
        %v266 = vld [vmem:[#allocation5 + $0x40] sm:$0xff]
        %v267 = vld [vmem:[#allocation5 + $0x48] sm:$0xff]
        %v268 = vld [vmem:[#allocation5 + $0x50] sm:$0xff]
        %v269 = vld [vmem:[#allocation5 + $0x58] sm:$0xff]
        %v270 = vld [vmem:[#allocation5 + $0x60] sm:$0xff]
        %v271 = vld [vmem:[#allocation5 + $0x68] sm:$0xff]
        %v272 = vld [vmem:[#allocation5 + $0x70] sm:$0xff]
        %v273 = vld [vmem:[#allocation5 + $0x78] sm:$0xff]
        %v274 = vld [vmem:[#allocation5 + $0x80] sm:$0xff]
        %v275 = vld [vmem:[#allocation5 + $0x88] sm:$0xff]
        %v276 = vld [vmem:[#allocation5 + $0x90] sm:$0xff]
        %v277 = vld [vmem:[#allocation5 + $0x98] sm:$0xff]
        %v278 = vld [vmem:[#allocation5 + $0xa0] sm:$0xff]
        %v279 = vld [vmem:[#allocation5 + $0xa8] sm:$0xff]
        %v280 = vld [vmem:[#allocation5 + $0xb0] sm:$0xff]
        %v281 = vld [vmem:[#allocation5 + $0xb8] sm:$0xff]
        %v282 = vld [vmem:[#allocation5 + $0xc0] sm:$0xff]
        %v283 = vld [vmem:[#allocation5 + $0xc8] sm:$0xff]
        %v284 = vld [vmem:[#allocation5 + $0xd0] sm:$0xff]
        %v285 = vld [vmem:[#allocation5 + $0xd8] sm:$0xff]
        %v286 = vld [vmem:[#allocation5 + $0xe0] sm:$0xff]
        %v287 = vld [vmem:[#allocation5 + $0xe8] sm:$0xff]
        %v288 = vld [vmem:[#allocation5 + $0xf0] sm:$0xff]
        %v289 = vld [vmem:[#allocation5 + $0xf8] sm:$0xff]
        %v290 = vld [vmem:[#allocation7] sm:$0x3]
        %v292 = vperm.slane %v290, 0
        %v293 = vperm.slane %v290, 1
        %296 = vmatpush.msra.mxu0 %v288
        %297 = vmatpush.msra.mxu0 %v286
        %298 = vmatpush.msra.mxu0 %v284
        %299 = vmatpush.msra.mxu0 %v282
        %300 = vmatpush.msra.mxu0 %v280
        %301 = vmatpush.msra.mxu0 %v278
        %302 = vmatpush.msra.mxu0 %v276
        %303 = vmatpush.msra.mxu0 %v274
        %304 = vmatpush.msra.mxu0 %v272
        %305 = vmatpush.msra.mxu0 %v270
        %306 = vmatpush.msra.mxu0 %v268
        %307 = vmatpush.msra.mxu0 %v266
        %308 = vmatpush.msra.mxu0 %v264
        %309 = vmatpush.msra.mxu0 %v262
        %310 = vmatpush.msra.mxu0 %v260
        %311 = vmatpush.msra.mxu0 %v258
        %312 = vmatmul.f32.gmra.mxu0 %v242
        %v313 = vpop.f32.mrf.mxu0
        %v314 = vadd.f32 %v292, %v313
        %315 = vmatmul.f32.gmra.mxu0 %v243
        %v316 = vpop.f32.mrf.mxu0
        %v317 = vadd.f32 %v292, %v316
        %318 = vmatmul.f32.gmra.mxu0 %v244
        %v319 = vpop.f32.mrf.mxu0
        %v320 = vadd.f32 %v292, %v319
        %321 = vmatmul.f32.gmra.mxu0 %v245
        %v322 = vpop.f32.mrf.mxu0
        %v323 = vadd.f32 %v292, %v322
        %324 = vmatmul.f32.gmra.mxu0 %v246
        %v325 = vpop.f32.mrf.mxu0
        %v326 = vadd.f32 %v292, %v325
        %327 = vmatmul.f32.gmra.mxu0 %v247
        %v328 = vpop.f32.mrf.mxu0
        %v329 = vadd.f32 %v292, %v328
        %330 = vmatmul.f32.gmra.mxu0 %v248
        %v331 = vpop.f32.mrf.mxu0
        %v332 = vadd.f32 %v292, %v331
        %333 = vmatmul.f32.gmra.mxu0 %v249
        %v334 = vpop.f32.mrf.mxu0
        %v335 = vadd.f32 %v292, %v334
        %336 = vmatmul.f32.gmra.mxu0 %v250
        %v337 = vpop.f32.mrf.mxu0
        %v338 = vadd.f32 %v292, %v337
        %339 = vmatmul.f32.gmra.mxu0 %v251
        %v340 = vpop.f32.mrf.mxu0
        %v341 = vadd.f32 %v292, %v340
        %342 = vmatmul.f32.gmra.mxu0 %v252
        %v343 = vpop.f32.mrf.mxu0
        %v344 = vadd.f32 %v292, %v343
        %345 = vmatmul.f32.gmra.mxu0 %v253
        %v346 = vpop.f32.mrf.mxu0
        %v347 = vadd.f32 %v292, %v346
        %348 = vmatmul.f32.gmra.mxu0 %v254
        %v349 = vpop.f32.mrf.mxu0
        %v350 = vadd.f32 %v292, %v349
        %351 = vmatmul.f32.gmra.mxu0 %v255
        %v352 = vpop.f32.mrf.mxu0
        %v353 = vadd.f32 %v292, %v352
        %354 = vmatmul.f32.gmra.mxu0 %v256
        %v355 = vpop.f32.mrf.mxu0
        %v356 = vadd.f32 %v292, %v355
        %357 = vmatmul.f32.gmra.mxu0 %v257
        %v358 = vpop.f32.mrf.mxu0
        %v359 = vadd.f32 %v292, %v358
        %360 = vdwg.mxu0
        %361 = vmatpush.msra.mxu0 %v289
        %362 = vmatpush.msra.mxu0 %v287
        %363 = vmatpush.msra.mxu0 %v285
        %364 = vmatpush.msra.mxu0 %v283
        %365 = vmatpush.msra.mxu0 %v281
        %366 = vmatpush.msra.mxu0 %v279
        %367 = vmatpush.msra.mxu0 %v277
        %368 = vmatpush.msra.mxu0 %v275
        %369 = vmatpush.msra.mxu0 %v273
        %370 = vmatpush.msra.mxu0 %v271
        %371 = vmatpush.msra.mxu0 %v269
        %372 = vmatpush.msra.mxu0 %v267
        %373 = vmatpush.msra.mxu0 %v265
        %374 = vmatpush.msra.mxu0 %v263
        %375 = vmatpush.msra.mxu0 %v261
        %376 = vmatpush.msra.mxu0 %v259
        %377 = vmatmul.f32.gmra.mxu0 %v242
        %v378 = vpop.f32.mrf.mxu0
        %v379 = vadd.f32 %v293, %v378
        %380 = vmatmul.f32.gmra.mxu0 %v243
        %v381 = vpop.f32.mrf.mxu0
        %v382 = vadd.f32 %v293, %v381
        %383 = vmatmul.f32.gmra.mxu0 %v244
        %v384 = vpop.f32.mrf.mxu0
        %v385 = vadd.f32 %v293, %v384
        %386 = vmatmul.f32.gmra.mxu0 %v245
        %v387 = vpop.f32.mrf.mxu0
        %v388 = vadd.f32 %v293, %v387
        %389 = vmatmul.f32.gmra.mxu0 %v246
        %v390 = vpop.f32.mrf.mxu0
        %v391 = vadd.f32 %v293, %v390
        %392 = vmatmul.f32.gmra.mxu0 %v247
        %v393 = vpop.f32.mrf.mxu0
        %v394 = vadd.f32 %v293, %v393
        %395 = vmatmul.f32.gmra.mxu0 %v248
        %v396 = vpop.f32.mrf.mxu0
        %v397 = vadd.f32 %v293, %v396
        %398 = vmatmul.f32.gmra.mxu0 %v249
        %v399 = vpop.f32.mrf.mxu0
        %v400 = vadd.f32 %v293, %v399
        %401 = vmatmul.f32.gmra.mxu0 %v250
        %v402 = vpop.f32.mrf.mxu0
        %v403 = vadd.f32 %v293, %v402
        %404 = vmatmul.f32.gmra.mxu0 %v251
        %v405 = vpop.f32.mrf.mxu0
        %v406 = vadd.f32 %v293, %v405
        %407 = vmatmul.f32.gmra.mxu0 %v252
        %v408 = vpop.f32.mrf.mxu0
        %v409 = vadd.f32 %v293, %v408
        %410 = vmatmul.f32.gmra.mxu0 %v253
        %v411 = vpop.f32.mrf.mxu0
        %v412 = vadd.f32 %v293, %v411
        %413 = vmatmul.f32.gmra.mxu0 %v254
        %v414 = vpop.f32.mrf.mxu0
        %v415 = vadd.f32 %v293, %v414
        %416 = vmatmul.f32.gmra.mxu0 %v255
        %v417 = vpop.f32.mrf.mxu0
        %v418 = vadd.f32 %v293, %v417
        %419 = vmatmul.f32.gmra.mxu0 %v256
        %v420 = vpop.f32.mrf.mxu0
        %v421 = vadd.f32 %v293, %v420
        %422 = vmatmul.f32.gmra.mxu0 %v257
        %v423 = vpop.f32.mrf.mxu0
        %v424 = vadd.f32 %v293, %v423
        %425 = vdwg.mxu0
        %426 = vst [vmem:[%s239] sm:$0xff] %v314
        %427 = vst [vmem:[%s239 + $0x8] sm:$0xff] %v379
        %428 = vst [vmem:[%s239 + $0x10] sm:$0xff] %v317
        %429 = vst [vmem:[%s239 + $0x18] sm:$0xff] %v382
        %430 = vst [vmem:[%s239 + $0x20] sm:$0xff] %v320
        %431 = vst [vmem:[%s239 + $0x28] sm:$0xff] %v385
        %432 = vst [vmem:[%s239 + $0x30] sm:$0xff] %v323
        %433 = vst [vmem:[%s239 + $0x38] sm:$0xff] %v388
        %434 = vst [vmem:[%s239 + $0x40] sm:$0xff] %v326
        %435 = vst [vmem:[%s239 + $0x48] sm:$0xff] %v391
        %436 = vst [vmem:[%s239 + $0x50] sm:$0xff] %v329
        %437 = vst [vmem:[%s239 + $0x58] sm:$0xff] %v394
        %438 = vst [vmem:[%s239 + $0x60] sm:$0xff] %v332
        %439 = vst [vmem:[%s239 + $0x68] sm:$0xff] %v397
        %440 = vst [vmem:[%s239 + $0x70] sm:$0xff] %v335
        %441 = vst [vmem:[%s239 + $0x78] sm:$0xff] %v400
        %442 = vst [vmem:[%s239 + $0x80] sm:$0xff] %v338
        %443 = vst [vmem:[%s239 + $0x88] sm:$0xff] %v403
        %444 = vst [vmem:[%s239 + $0x90] sm:$0xff] %v341
        %445 = vst [vmem:[%s239 + $0x98] sm:$0xff] %v406
        %446 = vst [vmem:[%s239 + $0xa0] sm:$0xff] %v344
        %447 = vst [vmem:[%s239 + $0xa8] sm:$0xff] %v409
        %448 = vst [vmem:[%s239 + $0xb0] sm:$0xff] %v347
        %449 = vst [vmem:[%s239 + $0xb8] sm:$0xff] %v412
        %450 = vst [vmem:[%s239 + $0xc0] sm:$0xff] %v350
        %451 = vst [vmem:[%s239 + $0xc8] sm:$0xff] %v415
        %452 = vst [vmem:[%s239 + $0xd0] sm:$0xff] %v353
        %453 = vst [vmem:[%s239 + $0xd8] sm:$0xff] %v418
        %454 = vst [vmem:[%s239 + $0xe0] sm:$0xff] %v356
        %455 = vst [vmem:[%s239 + $0xe8] sm:$0xff] %v421
        %456 = vst [vmem:[%s239 + $0xf0] sm:$0xff] %v359
        %457 = vst [vmem:[%s239 + $0xf8] sm:$0xff] %v424
        %s458 = sand.u32 %s113, 1
        %s459 = scalar_lea.sflag [#allocation4], %s458
        %s460 = sand.u32 %s113, 1
        %s461 = smul.addr %s460, 256
        %s462 = scalar_lea.vmem [#allocation8], %s461
        // Predicated region
        $region45: #{tpu_custom_call.1} parent=31 // pred_check
          %p463 = pneg %p123
        $region46: #{tpu_custom_call.1} parent=31 // pred_check_branch
          %465 = sbr.rel (%p463) target = $region48
        $region47: #{tpu_custom_call.1} parent=31 // pred_region
          %s466 = smul.u32 16, %s26
          %468 = vsyncadd %s459, 0
          %s469 = smul.addr %s466, 2
          %s470 = smul.addr %s25, 64
          %s471 = sadd.s32 %s469, %s470
          %s472 = smul.addr %s471, 8
          %s473 = scalar_lea.hbm %s3, %s472
          %s474 = sshll.u32 %s462, 4
          %s475 = int_to_ptr.vmem [resolvable:$true] %s474
          %s476 = sshll.u32 %s473, 4
          %s477 = int_to_ptr.hbm [resolvable:$true] %s476
          %482 = dma.vmem_to_hbm [thread:$0]  %s475, 4096, %s477, %s459, 256, 256, 16
        $region48: #{tpu_custom_call.1} parent=31 // pred_fallthru
          _
      $region32: #{tpu_custom_call.1} parent=5 // pred_fallthru
        _
      %p483 = scmp.le.s32.totalorder 2, %s16
      // Predicated region
      $region49: #{tpu_custom_call.1} parent=5 // pred_check
        %p484 = pneg %p483
      $region50: #{tpu_custom_call.1} parent=5 // pred_check_branch
        %486 = sbr.rel (%p484) target = $region52
      $region51: #{tpu_custom_call.1} parent=5 // pred_region
        %s487 = ssub.s32 %s16, 2
        // Predicated region
        $region53: #{tpu_custom_call.1} parent=51 // pred_check
          %p488 = pneg %p129
        $region54: #{tpu_custom_call.1} parent=51 // pred_check_branch
          %490 = sbr.rel (%p488) target = $region56
        $region55: #{tpu_custom_call.1} parent=51 // pred_region
          %s491 = sand.u32 %s114, 1
          %s492 = scalar_lea.sflag [#allocation4], %s491
          %s493 = sand.u32 %s114, 1
          %s494 = smul.addr %s493, 256
          %s495 = scalar_lea.vmem [#allocation8], %s494
          %497 = dma.done %s492, 4096
        $region56: #{tpu_custom_call.1} parent=51 // pred_fallthru
          _
      $region52: #{tpu_custom_call.1} parent=5 // pred_fallthru
        _
    $region6: #{tpu_custom_call.1} parent=1 // loop_footer
      %s20 = sadd.s32 1, %s16
    $region7: #{tpu_custom_call.1} parent=1 // loop_footer_branch
      %15 = sbr.rel target = $region3
    $region8: #{tpu_custom_call.1} parent=1 // loop_exit
      _
    %498 = vsyncpa [#allocation3], 1
    %s499 = scalar_lea.sflag [#allocation3], 1
    %500 = vsyncpa %s499, 1
    %501 = vsyncpa [#allocation6], 1
    %502 = vsyncpa [#allocation4], 1
    %s503 = scalar_lea.sflag [#allocation4], 1
    %504 = vsyncpa %s503, 1

</llo_original>
